<compile_context>
chip_gen: v7x
topology: tpu7x:2x2x1
jax: 0.10.0
libtpu: 0.0.40
codegen_flags: <defaults>
</compile_context>

<pallas_src>
import functools

import jax
import jax.numpy as jnp
from jax import lax
from jax.experimental import pallas as pl
from jax.experimental.pallas import tpu as pltpu

_VMEM_LIMIT = 48 * 1024 * 1024


# ---------------------------------------------------------------------------
# char CNN kernel: conv1d(K, pad=1) + relu + masked max-pool + FC, row-tiled.
# ---------------------------------------------------------------------------
def char_cnn_kernel(xcp_ref, m_ref, wcat_ref, bc_ref, wfc_ref, bfc_ref, o_ref):
    br, lp, cc = xcp_ref.shape                 # lp = L + 2 (zero padded)
    l = m_ref.shape[1]                         # L
    f = bc_ref.shape[1]                        # conv filters
    k_taps = wcat_ref.shape[1] // f

    # One wide matmul on the contiguous padded rows (no per-tap input copies).
    xp = xcp_ref[...].reshape(br * lp, cc).astype(jnp.bfloat16)
    y = jnp.dot(xp, wcat_ref[...].astype(jnp.bfloat16),
                preferred_element_type=jnp.float32)          # (br*lp, K*F)
    y = y.reshape(br, lp, k_taps * f)

    # Combine taps by summing shifted slices of the (small) F-wide outputs.
    acc = None
    for ki in range(k_taps):
        part = y[:, ki:ki + l, ki * f:(ki + 1) * f]           # (br, L, F)
        acc = part if acc is None else acc + part
    acc = acc + bc_ref[...]                                   # conv bias
    acc = jnp.maximum(acc, 0.0)                               # relu

    m = m_ref[...]                                            # (br, L) lane-dense
    acc = jnp.where(m[:, :, None] > 0.0, acc, jnp.float32(-1e30))
    pooled = jnp.max(acc, axis=1)                             # (br, F)
    # Guard all-masked (padded) rows; no-op for real tokens (post-ReLU >= 0).
    pooled = jnp.maximum(pooled, 0.0)

    o_ref[...] = (jnp.dot(pooled.astype(jnp.bfloat16),
                          wfc_ref[...].astype(jnp.bfloat16),
                          preferred_element_type=jnp.float32) + bfc_ref[...])


def char_cnn(xc_pad, c_mask, w_cat, b_conv, w_fc, b_fc, *, block_rows):
    n_pad, lp, cc = xc_pad.shape
    l = c_mask.shape[1]
    dc = w_fc.shape[1]
    grid = (n_pad // block_rows,)
    return pl.pallas_call(
        char_cnn_kernel,
        out_shape=jax.ShapeDtypeStruct((n_pad, dc), jnp.float32),
        grid=grid,
        in_specs=[pl.BlockSpec((block_rows, lp, cc), lambda i: (i, 0, 0)),
                  pl.BlockSpec((block_rows, l), lambda i: (i, 0)),
                  pl.BlockSpec(w_cat.shape, lambda i: (0, 0)),
                  pl.BlockSpec(b_conv.shape, lambda i: (0, 0)),
                  pl.BlockSpec(w_fc.shape, lambda i: (0, 0)),
                  pl.BlockSpec(b_fc.shape, lambda i: (0, 0))],
        out_specs=pl.BlockSpec((block_rows, dc), lambda i: (i, 0)),
        compiler_params=pltpu.CompilerParams(
            dimension_semantics=("parallel",),
            vmem_limit_bytes=_VMEM_LIMIT),
    )(xc_pad, c_mask, w_cat, b_conv, w_fc, b_fc)


# ---------------------------------------------------------------------------
# Fused bidirectional LSTM layer: input projection + both recurrences in one
# kernel, grid over T-chunks (state carried in scratch across chunks).
# ---------------------------------------------------------------------------
def bilstm_kernel(sl_ref, featf_ref, featb_ref,
                  wihf_ref, bihf_ref, whhf_ref,
                  wihb_ref, bihb_ref, whhb_ref,
                  outf_ref, outb_ref,
                  xf0, xf1, xf2, xf3, xb0, xb1, xb2, xb3,
                  hf_sc, cf_sc, hb_sc, cb_sc,
                  *, t_total):
    i = pl.program_id(0)
    tc, b, din = featf_ref.shape
    h = outf_ref.shape[-1]

    @pl.when(i == 0)
    def _init():
        hf_sc[...] = jnp.zeros_like(hf_sc)
        cf_sc[...] = jnp.zeros_like(cf_sc)
        hb_sc[...] = jnp.zeros_like(hb_sc)
        cb_sc[...] = jnp.zeros_like(cb_sc)

    # Per-chunk input projections: one wide bf16 MXU matmul per direction,
    # split ONCE per chunk into per-gate scratch (keeps the per-step recurrence
    # free of lane sub-slices on the h-dependency chain).
    def project(feat_ref, wih_ref, bih_ref, sc):
        flat = feat_ref[...].reshape(tc * b, din).astype(jnp.bfloat16)
        xg = (jnp.dot(flat, wih_ref[...].astype(jnp.bfloat16),
                      preferred_element_type=jnp.float32)
              + bih_ref[...]).reshape(tc, b, 4 * h)
        for k in range(4):
            sc[k][...] = xg[:, :, k * h:(k + 1) * h]

    project(featf_ref, wihf_ref, bihf_ref, (xf0, xf1, xf2, xf3))
    project(featb_ref, wihb_ref, bihb_ref, (xb0, xb1, xb2, xb3))

    sl = sl_ref[...]                                  # (B, 1) int32 lengths

    def cell(g_i, g_f, g_g, g_o, h_prev, c_prev, whh_ref):
        # per-gate recurrent matmuls: 4 independent (B,H)@(H,H) — no slicing
        # downstream of h_prev.
        ig = jax.nn.sigmoid(g_i + jnp.dot(h_prev, whh_ref[0],
                                          preferred_element_type=jnp.float32))
        fg = jax.nn.sigmoid(g_f + jnp.dot(h_prev, whh_ref[1],
                                          preferred_element_type=jnp.float32))
        gg = jnp.tanh(g_g + jnp.dot(h_prev, whh_ref[2],
                                    preferred_element_type=jnp.float32))
        og = jax.nn.sigmoid(g_o + jnp.dot(h_prev, whh_ref[3],
                                          preferred_element_type=jnp.float32))
        c_new = fg * c_prev + ig * gg
        h_new = og * jnp.tanh(c_new)
        return h_new, c_new

    def step(s, carry):
        # --- forward chain: global timestep t = i*tc + s -------------------
        t_f = i * tc + s
        h_new, c_new = cell(xf0[s], xf1[s], xf2[s], xf3[s],
                            hf_sc[...], cf_sc[...], whhf_ref)
        keep = t_f < sl                               # packed-seq gate (B,1)
        hf_sc[...] = jnp.where(keep, h_new, hf_sc[...])
        cf_sc[...] = jnp.where(keep, c_new, cf_sc[...])
        outf_ref[s] = jnp.where(keep, h_new, jnp.zeros_like(h_new))

        # --- backward chain: global timestep T-1 - (i*tc + s) ---------------
        r = tc - 1 - s
        t_b = t_total - 1 - (i * tc + s)
        hb_new, cb_new = cell(xb0[r], xb1[r], xb2[r], xb3[r],
                              hb_sc[...], cb_sc[...], whhb_ref)
        keepb = t_b < sl
        hb_sc[...] = jnp.where(keepb, hb_new, hb_sc[...])
        cb_sc[...] = jnp.where(keepb, cb_new, cb_sc[...])
        outb_ref[r] = jnp.where(keepb, hb_new, jnp.zeros_like(hb_new))
        return carry

    lax.fori_loop(0, tc, step, 0)


def bilstm_layer(feat_tb, sl_col, lp, T, B, H, t_chunk):
    nc = T // t_chunk
    din = feat_tb.shape[-1]
    kern = functools.partial(bilstm_kernel, t_total=T)
    out_f, out_b = pl.pallas_call(
        kern,
        out_shape=(jax.ShapeDtypeStruct((T, B, H), jnp.float32),
                   jax.ShapeDtypeStruct((T, B, H), jnp.float32)),
        grid=(nc,),
        in_specs=[
            pl.BlockSpec((B, 1), lambda i: (0, 0)),                       # seq_len
            pl.BlockSpec((t_chunk, B, din), lambda i: (i, 0, 0)),         # feat fwd view
            pl.BlockSpec((t_chunk, B, din),                                # feat bwd view
                         lambda i, _nc=nc: (_nc - 1 - i, 0, 0)),
            pl.BlockSpec((din, 4 * H), lambda i: (0, 0)),                 # wih fwd
            pl.BlockSpec((1, 4 * H), lambda i: (0, 0)),                   # bias fwd
            pl.BlockSpec((4, H, H), lambda i: (0, 0, 0)),                 # whh fwd
            pl.BlockSpec((din, 4 * H), lambda i: (0, 0)),                 # wih bwd
            pl.BlockSpec((1, 4 * H), lambda i: (0, 0)),                   # bias bwd
            pl.BlockSpec((4, H, H), lambda i: (0, 0, 0)),                 # whh bwd
        ],
        out_specs=(pl.BlockSpec((t_chunk, B, H), lambda i: (i, 0, 0)),
                   pl.BlockSpec((t_chunk, B, H),
                                lambda i, _nc=nc: (_nc - 1 - i, 0, 0))),
        scratch_shapes=(
            [pltpu.VMEM((t_chunk, B, H), jnp.float32) for _ in range(8)]   # xg gates
            + [pltpu.VMEM((B, H), jnp.float32) for _ in range(4)]),        # h/c states
        compiler_params=pltpu.CompilerParams(
            dimension_semantics=("arbitrary",),
            vmem_limit_bytes=_VMEM_LIMIT),
    )(sl_col, feat_tb, feat_tb,
      lp["fwd"]["wih"], lp["fwd"]["b"], lp["fwd"]["whh"],
      lp["bwd"]["wih"], lp["bwd"]["b"], lp["bwd"]["whh"])
    return out_f, out_b


# ---------------------------------------------------------------------------
# Head: fused output linear (split fwd/bwd weights), first-index argmax and
# masked cross-entropy accumulated into a (1,1) scalar output.
# ---------------------------------------------------------------------------
def head_kernel(hf_ref, hb_ref, wf_ref, wb_ref, b_ref, y_ref, m_ref,
                pred_ref, loss_ref):
    i = pl.program_id(0)
    tc, b, hdim = hf_ref.shape
    rows = tc * b
    logits = (jnp.dot(hf_ref[...].reshape(rows, hdim).astype(jnp.bfloat16),
                      wf_ref[...].astype(jnp.bfloat16),
                      preferred_element_type=jnp.float32)
              + jnp.dot(hb_ref[...].reshape(rows, hdim).astype(jnp.bfloat16),
                        wb_ref[...].astype(jnp.bfloat16),
                        preferred_element_type=jnp.float32)
              + b_ref[...])
    c = logits.shape[-1]
    lg = logits.reshape(tc, b, c)

    maxv = jnp.max(lg, axis=-1, keepdims=True)                     # (tc,b,1)
    col = lax.broadcasted_iota(jnp.int32, lg.shape, 2)
    # first-index argmax (matches torch.argmax for distinct maxima)
    pred_ref[...] = jnp.min(jnp.where(lg >= maxv, col, c), axis=-1)

    lse = maxv[:, :, 0] + jnp.log(jnp.sum(jnp.exp(lg - maxv), axis=-1))
    onehot = (col == y_ref[...][:, :, None]).astype(jnp.float32)
    tgt = jnp.sum(onehot * lg, axis=-1)
    tok = (lse - tgt) * m_ref[...]                                 # (tc,b)

    @pl.when(i == 0)
    def _():
        loss_ref[...] = jnp.zeros_like(loss_ref)

    loss_ref[...] += jnp.sum(tok, axis=(0, 1), keepdims=True)


def head(out_f, out_b, w_f, w_b, b_out, y_tb, m_tb, *, t_chunk):
    T, B, H = out_f.shape
    C = w_f.shape[1]
    nc = T // t_chunk
    return pl.pallas_call(
        head_kernel,
        out_shape=(jax.ShapeDtypeStruct((T, B), jnp.int32),
                   jax.ShapeDtypeStruct((1, 1), jnp.float32)),
        grid=(nc,),
        in_specs=[pl.BlockSpec((t_chunk, B, H), lambda i: (i, 0, 0)),
                  pl.BlockSpec((t_chunk, B, H), lambda i: (i, 0, 0)),
                  pl.BlockSpec((H, C), lambda i: (0, 0)),
                  pl.BlockSpec((H, C), lambda i: (0, 0)),
                  pl.BlockSpec((1, C), lambda i: (0, 0)),
                  pl.BlockSpec((t_chunk, B), lambda i: (i, 0)),
                  pl.BlockSpec((t_chunk, B), lambda i: (i, 0))],
        out_specs=(pl.BlockSpec((t_chunk, B), lambda i: (i, 0)),
                   pl.BlockSpec((1, 1), lambda i: (0, 0))),
        compiler_params=pltpu.CompilerParams(
            dimension_semantics=("arbitrary",),          # loss accumulator
            vmem_limit_bytes=_VMEM_LIMIT),
    )(out_f, out_b, w_f, w_b, b_out, y_tb, m_tb)


# ---------------------------------------------------------------------------
# model wrapper (glue) — time-major (T, B, ·) layout throughout.
# ---------------------------------------------------------------------------
def cnn_bilstm_forward(params, task_id, x, y, seq_len, *, lstm_t_chunk=None):
    B, T = x.shape
    L = params["w2c"].shape[1]
    H = params["hidden_size"]
    num_layers = params["num_layers"]
    N = B * T

    # embeddings (gather is glue); only tiny int (B,T) arrays get transposed.
    x_tb = x.T                                                # (T,B)
    words_emb = params["word_table"][x_tb]                    # (T,B,Dw)
    char_ids = params["w2c"][x_tb]                            # (T,B,L)
    char_emb = params["char_table"][char_ids]                 # (T,B,L,Cc)
    c_mask = (char_ids != 0).astype(jnp.float32).reshape(N, L)

    Cc = char_emb.shape[-1]
    xc = char_emb.reshape(N, L, Cc)
    xc_pad = jnp.pad(xc, ((0, 0), (1, 1), (0, 0)))            # conv1d padding = K//2
    # TODO(synk): embedding dropout / word_dropout omitted (eval-mode semantics).

    br = 256 if N >= 256 else 8                               # row tile for char CNN
    n_pad = ((N + br - 1) // br) * br
    if n_pad != N:
        xc_pad = jnp.pad(xc_pad, ((0, n_pad - N), (0, 0), (0, 0)))
        c_mask_p = jnp.pad(c_mask, ((0, n_pad - N), (0, 0)))
    else:
        c_mask_p = c_mask
    char_feat = char_cnn(xc_pad, c_mask_p, params["w_conv_cat"], params["b_conv"],
                         params["w_cfc"], params["b_cfc"], block_rows=br)[:N]

    feat = jnp.concatenate([words_emb, char_feat.reshape(T, B, -1)], axis=-1)

    seq_len = seq_len.astype(jnp.int32)
    sl_col = seq_len.reshape(B, 1)

    if lstm_t_chunk is None:
        tc = min(T, 64)
        while T % tc:
            tc -= 1
    else:
        tc = lstm_t_chunk
    assert T % tc == 0

    out_f = out_b = None
    for layer in range(num_layers):
        out_f, out_b = bilstm_layer(feat, sl_col, params["lstm"][layer], T, B, H, tc)
        if layer + 1 < num_layers:
            feat = jnp.concatenate([out_f, out_b], axis=-1)

    # TODO(synk): output dropout omitted (inplace nn.Dropout; eval-mode no-op).
    w_out, b_out = params["out"][task_id[0]]
    w_f, w_b = w_out[:H], w_out[H:]                           # split: no activation concat
    y_tb = y.T.astype(jnp.int32)                              # (T,B)
    m_tb = (jnp.arange(T)[:, None] < seq_len[None, :]).astype(jnp.float32)

    head_tc = 128 if (T > 128 and T % 128 == 0) else T
    pred_tb, loss_sum = head(out_f, out_b, w_f, w_b, b_out, y_tb, m_tb,
                             t_chunk=head_tc)
    loss = loss_sum[0, 0] / jnp.maximum(jnp.sum(m_tb), 1.0)   # CE mean over valid tokens
    return {"loss": loss, "pred": pred_tb.T}


# ---------------------------------------------------------------------------
# deterministic parameter init
# ---------------------------------------------------------------------------
def init_params(key, V, Vc, L, Dw, Cc, F, Dc, H, num_layers, n_class_per_task):
    ks = jax.random.split(key, 64)
    it = iter(range(64))

    def nrm(shape, s=0.1):
        return s * jax.random.normal(ks[next(it)], shape, jnp.float32)

    word_table = nrm((V, Dw))
    char_table = nrm((Vc, Cc)).at[0].set(0.0)                 # char id 0 = pad

    # deterministic word -> chars lookup table (mimics CNNCharEmbedding's table)
    v_ids = jnp.arange(V)[:, None]
    pos = jnp.arange(L)[None, :]
    w2c = ((v_ids * 7 + pos * 3) % (Vc - 1) + 1).astype(jnp.int32)
    char_len = 3 + (jnp.arange(V) % (L - 2))
    w2c = jnp.where(pos < char_len[:, None], w2c, 0)

    K = 3
    w_conv_cat = nrm((Cc, K * F))                             # taps concatenated on columns
    b_conv = nrm((1, F))
    w_cfc = nrm((F, Dc))
    b_cfc = nrm((1, Dc))

    lstm = []
    din = Dw + Dc
    for _ in range(num_layers):
        lp = {}
        for d in ("fwd", "bwd"):
            lp[d] = dict(wih=nrm((din, 4 * H)),               # gate order i,f,g,o
                         whh=nrm((4, H, H)),                  # per-gate recurrent weights
                         b=nrm((1, 4 * H)))                   # b_ih + b_hh combined
        lstm.append(lp)
        din = 2 * H

    out = []
    for c in n_class_per_task:
        out.append((nrm((2 * H, c)), jnp.zeros((1, c), jnp.float32)))

    return dict(word_table=word_table, char_table=char_table, w2c=w2c,
                w_conv_cat=w_conv_cat, b_conv=b_conv, w_cfc=w_cfc, b_cfc=b_cfc,
                lstm=lstm, out=out, hidden_size=H, num_layers=num_layers)


if __name__ == "__main__":
    B, T, L = 2, 8, 6
    V, Vc = 50, 30
    Dw, Cc, F, Dc = 32, 16, 16, 16
    H, num_layers = 32, 1
    n_class_per_task = [5, 7]
    task_id = [0]

    key = jax.random.PRNGKey(0)
    kp, kx, ky = jax.random.split(key, 3)
    params = init_params(kp, V, Vc, L, Dw, Cc, F, Dc, H, num_layers, n_class_per_task)

    x = jax.random.randint(kx, (B, T), 1, V, dtype=jnp.int32)
    seq_len = jnp.array([T, 5], dtype=jnp.int32)
    y = jax.random.randint(ky, (B, T), 0, n_class_per_task[task_id[0]],
                           dtype=jnp.int32)

    # lstm_t_chunk=4 exercises multi-chunk state carry (grid of 2 over T=8).
    out = cnn_bilstm_forward(params, task_id, x, y, seq_len, lstm_t_chunk=4)
    jax.block_until_ready((out["loss"], out["pred"]))
    assert out["pred"].shape == (B, T)
    assert out["loss"].shape == ()
    assert bool(jnp.isfinite(out["loss"]))
    print("KERNEL_OK")
</pallas_src>

<mosaic_0001>
module attributes {stable_mosaic.version = 11 : i64} {
  func.func @char_cnn_kernel(%arg0: i32, %arg1: memref<8x8x16xf32, #tpu.memory_space<vmem>>, %arg2: memref<8x6xf32, #tpu.memory_space<vmem>>, %arg3: memref<16x48xf32, #tpu.memory_space<vmem>>, %arg4: memref<1x16xf32, #tpu.memory_space<vmem>>, %arg5: memref<16x16xf32, #tpu.memory_space<vmem>>, %arg6: memref<1x16xf32, #tpu.memory_space<vmem>>, %arg7: memref<8x16xf32, #tpu.memory_space<vmem>>) attributes {dimension_semantics = [#tpu.dimension_semantics<parallel>], iteration_bounds = array<i64: 2>, scalar_prefetch = 0 : i64, scratch_operands = 0 : i64, tpu.core_type = #tpu.core_type<tc>, window_params = [{transform_indices = @transform_0, window_bounds = array<i64: 8, 8, 16>}, {transform_indices = @transform_1, window_bounds = array<i64: 8, 6>}, {pipeline_mode = #tpu.pipeline_mode<synchronous>, transform_indices = @transform_2, window_bounds = array<i64: 16, 48>}, {pipeline_mode = #tpu.pipeline_mode<synchronous>, transform_indices = @transform_3, window_bounds = array<i64: 1, 16>}, {pipeline_mode = #tpu.pipeline_mode<synchronous>, transform_indices = @transform_4, window_bounds = array<i64: 16, 16>}, {pipeline_mode = #tpu.pipeline_mode<synchronous>, transform_indices = @transform_5, window_bounds = array<i64: 1, 16>}, {transform_indices = @transform_6, window_bounds = array<i64: 8, 16>}]} {
    %c0 = arith.constant 0 : index
    %c0_0 = arith.constant 0 : index
    %c0_1 = arith.constant 0 : index
    %0 = vector.load %arg1[%c0, %c0_0, %c0_1] : memref<8x8x16xf32, #tpu.memory_space<vmem>>, vector<8x8x16xf32>
    %1 = vector.shape_cast %0 : vector<8x8x16xf32> to vector<64x16xf32>
    %2 = arith.truncf %1 : vector<64x16xf32> to vector<64x16xbf16>
    %c0_2 = arith.constant 0 : index
    %c0_3 = arith.constant 0 : index
    %3 = vector.load %arg3[%c0_2, %c0_3] : memref<16x48xf32, #tpu.memory_space<vmem>>, vector<16x48xf32>
    %4 = arith.truncf %3 : vector<16x48xf32> to vector<16x48xbf16>
    %cst = arith.constant dense<0.000000e+00> : vector<64x48xf32>
    %5 = tpu.matmul %2, %4, %cst {dimension_numbers = #tpu.dot_dimension_numbers<[1], [0], [0], [1], [0, 0, 1, 1], [], []>} : vector<64x16xbf16>, vector<16x48xbf16>, vector<64x48xf32> -> vector<64x48xf32>
    %6 = vector.shape_cast %5 : vector<64x48xf32> to vector<8x8x48xf32>
    %7 = vector.extract_strided_slice %6 {offsets = [0, 0, 0], sizes = [8, 6, 16], strides = [1, 1, 1]} : vector<8x8x48xf32> to vector<8x6x16xf32>
    %8 = vector.extract_strided_slice %6 {offsets = [0, 1, 16], sizes = [8, 6, 16], strides = [1, 1, 1]} : vector<8x8x48xf32> to vector<8x6x16xf32>
    %9 = arith.addf %7, %8 : vector<8x6x16xf32>
    %10 = vector.extract_strided_slice %6 {offsets = [0, 2, 32], sizes = [8, 6, 16], strides = [1, 1, 1]} : vector<8x8x48xf32> to vector<8x6x16xf32>
    %11 = arith.addf %9, %10 : vector<8x6x16xf32>
    %c0_4 = arith.constant 0 : index
    %c0_5 = arith.constant 0 : index
    %12 = vector.load %arg4[%c0_4, %c0_5] : memref<1x16xf32, #tpu.memory_space<vmem>>, vector<1x16xf32>
    %13 = vector.shape_cast %12 : vector<1x16xf32> to vector<1x1x16xf32>
    %14 = vector.broadcast %13 : vector<1x1x16xf32> to vector<8x6x16xf32>
    %15 = arith.addf %11, %14 : vector<8x6x16xf32>
    %cst_6 = arith.constant 0.000000e+00 : f32
    %16 = vector.broadcast %cst_6 : f32 to vector<8x6x16xf32>
    %17 = arith.maximumf %15, %16 : vector<8x6x16xf32>
    %c0_7 = arith.constant 0 : index
    %c0_8 = arith.constant 0 : index
    %18 = vector.load %arg2[%c0_7, %c0_8] : memref<8x6xf32, #tpu.memory_space<vmem>>, vector<8x6xf32>
    %19 = vector.shape_cast %18 : vector<8x6xf32> to vector<8x6x1xf32>
    %cst_9 = arith.constant 0.000000e+00 : f32
    %20 = vector.broadcast %cst_9 : f32 to vector<8x6x1xf32>
    %21 = arith.cmpf ogt, %19, %20 : vector<8x6x1xf32>
    %cst_10 = arith.constant -1.000000e+30 : f32
    %22 = vector.shape_cast %21 : vector<8x6x1xi1> to vector<8x6x1xi1>
    %23 = vector.broadcast %22 : vector<8x6x1xi1> to vector<8x6x16xi1>
    %24 = vector.broadcast %cst_10 : f32 to vector<8x6x16xf32>
    %25 = arith.select %23, %17, %24 : vector<8x6x16xi1>, vector<8x6x16xf32>
    %cst_11 = arith.constant dense<0xFF800000> : vector<8x16xf32>
    %26 = vector.multi_reduction <maximumf>, %25, %cst_11 [1] : vector<8x6x16xf32> to vector<8x16xf32>
    %cst_12 = arith.constant 0.000000e+00 : f32
    %27 = vector.broadcast %cst_12 : f32 to vector<8x16xf32>
    %28 = arith.maximumf %26, %27 : vector<8x16xf32>
    %29 = arith.truncf %28 : vector<8x16xf32> to vector<8x16xbf16>
    %c0_13 = arith.constant 0 : index
    %c0_14 = arith.constant 0 : index
    %30 = vector.load %arg5[%c0_13, %c0_14] : memref<16x16xf32, #tpu.memory_space<vmem>>, vector<16x16xf32>
    %31 = arith.truncf %30 : vector<16x16xf32> to vector<16x16xbf16>
    %cst_15 = arith.constant dense<0.000000e+00> : vector<8x16xf32>
    %32 = tpu.matmul %29, %31, %cst_15 {dimension_numbers = #tpu.dot_dimension_numbers<[1], [0], [0], [1], [0, 0, 1, 1], [], []>} : vector<8x16xbf16>, vector<16x16xbf16>, vector<8x16xf32> -> vector<8x16xf32>
    %c0_16 = arith.constant 0 : index
    %c0_17 = arith.constant 0 : index
    %33 = vector.load %arg6[%c0_16, %c0_17] : memref<1x16xf32, #tpu.memory_space<vmem>>, vector<1x16xf32>
    %34 = vector.broadcast %33 : vector<1x16xf32> to vector<8x16xf32>
    %35 = arith.addf %32, %34 : vector<8x16xf32>
    %c0_18 = arith.constant 0 : index
    %c0_19 = arith.constant 0 : index
    %36 = vector.load %arg7[%c0_18, %c0_19] : memref<8x16xf32, #tpu.memory_space<vmem>>, vector<8x16xf32>
    tpu.vector_store %arg7[%c0_18, %c0_19], %35 {strides = array<i32>} : memref<8x16xf32, #tpu.memory_space<vmem>>, vector<8x16xf32>,
    return
  }
  func.func @transform_0(%arg0: i32) -> (i32, i32, i32) {
    %c0_i32 = arith.constant 0 : i32
    %c0_i32_0 = arith.constant 0 : i32
    %c0_i32_1 = arith.constant 0 : i32
    return %arg0, %c0_i32, %c0_i32_0 : i32, i32, i32
  }
  func.func @transform_1(%arg0: i32) -> (i32, i32) {
    %c0_i32 = arith.constant 0 : i32
    %c0_i32_0 = arith.constant 0 : i32
    return %arg0, %c0_i32 : i32, i32
  }
  func.func @transform_2(%arg0: i32) -> (i32, i32) {
    %c0_i32 = arith.constant 0 : i32
    %c0_i32_0 = arith.constant 0 : i32
    %c0_i32_1 = arith.constant 0 : i32
    return %c0_i32, %c0_i32_0 : i32, i32
  }
  func.func @transform_3(%arg0: i32) -> (i32, i32) {
    %c0_i32 = arith.constant 0 : i32
    %c0_i32_0 = arith.constant 0 : i32
    %c0_i32_1 = arith.constant 0 : i32
    return %c0_i32, %c0_i32_0 : i32, i32
  }
  func.func @transform_4(%arg0: i32) -> (i32, i32) {
    %c0_i32 = arith.constant 0 : i32
    %c0_i32_0 = arith.constant 0 : i32
    %c0_i32_1 = arith.constant 0 : i32
    return %c0_i32, %c0_i32_0 : i32, i32
  }
  func.func @transform_5(%arg0: i32) -> (i32, i32) {
    %c0_i32 = arith.constant 0 : i32
    %c0_i32_0 = arith.constant 0 : i32
    %c0_i32_1 = arith.constant 0 : i32
    return %c0_i32, %c0_i32_0 : i32, i32
  }
  func.func @transform_6(%arg0: i32) -> (i32, i32) {
    %c0_i32 = arith.constant 0 : i32
    %c0_i32_0 = arith.constant 0 : i32
    return %arg0, %c0_i32 : i32, i32
  }
}

</mosaic_0001>

<llo_original>
// kernel: tpu_custom_call.1
$region0: #{tpu_custom_call.1}
  #allocation0 [shape = 'u32[]', space=smem, size = 0x4, offset = 0x4, fixed_abs, tag = 'smem constant byte address 0x4 - core index']
  #allocation1 [shape = 'u32[144,128]{1,0:T(1,128)}', space=vmem, size = 0x12000, scoped, tag = 'internal scratch']
  %s0 = inlined_call_operand.hbm [shape: f32[16,8,16], index: 0, kind: input, shape index: {}]
  %s1 = inlined_call_operand.vmem [shape: f32[16,6], index: 1, kind: input, shape index: {}]
  %s2 = inlined_call_operand.vmem [shape: f32[16,48], index: 2, kind: input, shape index: {}]
  %s3 = inlined_call_operand.vmem [shape: f32[1,16], index: 3, kind: input, shape index: {}]
  %s4 = inlined_call_operand.vmem [shape: f32[16,16], index: 4, kind: input, shape index: {}]
  %s5 = inlined_call_operand.vmem [shape: f32[1,16], index: 5, kind: input, shape index: {}]
  %s6 = inlined_call_operand.hbm [shape: f32[16,16], index: 6, kind: output, shape index: {}]
  %s7 = sld [smem:[#allocation0]]
  $region61: #{tpu_custom_call.1} parent=0
    _
  %s9 = ssub.s32 1, %s7
  %s10 = scalar_select 0, %s9, %s7
  $region1: #{tpu_custom_call.1} parent=0
    #allocation2 [shape = 'u8[65536]{0}', space=vmem, size = 0x10000, scoped, tag = 'input window, operand 0']
    #allocation3 [shape = 's32[2]{0}', space=sflag, size = 0x8, scoped, tag = 'scoped memory for tpu_custom_call.1']
    #allocation4 [shape = 's32[2]{0}', space=sflag, size = 0x8, scoped, tag = 'scoped memory for tpu_custom_call.1']
    #allocation5 [shape = 'u8[8192]{0}', space=vmem, size = 0x2000, scoped, tag = 'output window, operand 0']
    %11 = vsyncpa [#allocation3], 0
    %s12 = scalar_lea.sflag [#allocation3], 1
    %13 = vsyncpa %s12, 0
    %14 = vsyncpa [#allocation4], 0
    %s15 = scalar_lea.sflag [#allocation4], 1
    %16 = vsyncpa %s15, 0
    loop: start=0, step=1, limit=4
    $region2: #{tpu_custom_call.1} parent=1 // loop_pre_header
      _
    $region3: #{tpu_custom_call.1} parent=1 // loop_header
      %s18 = sphi 0, %s22
      %p19 = scmp.ge.s32.totalorder %s18, 4
      %s28 = sphi 0, %s30
      %s31 = sphi 0, %s28
      %s32 = sphi 0, %s31
      %s48 = sphi 0, %s32
      %s54 = sphi 0, %s56
      %s57 = sphi 0, %s54
      %s58 = sphi 0, %s57
      %s74 = sphi 0, %s58
      %s78 = sphi 0, %s78
      %s80 = sphi 0, %s78
      %s81 = sphi 0, %s80
      %s95 = sphi 0, %s81
      %s99 = sphi 0, %s99
      %s101 = sphi 0, %s99
      %s102 = sphi 0, %s101
      %s116 = sphi 0, %s102
      %s120 = sphi 0, %s120
      %s122 = sphi 0, %s120
      %s123 = sphi 0, %s122
      %s137 = sphi 0, %s123
      %s141 = sphi 0, %s141
      %s143 = sphi 0, %s141
      %s144 = sphi 0, %s143
      %s158 = sphi 0, %s144
      %s164 = sphi 0, %s166
      %s167 = sphi 0, %s164
      %s168 = sphi 0, %s167
      %s184 = sphi 0, %s168
    $region4: #{tpu_custom_call.1} parent=1 // loop_header_branch
      %21 = sbr.rel (%p19) target = $region8
    $region5: #{tpu_custom_call.1} parent=1 // loop_body
      %s23 = ssub.s32 %s18, 1
      %s24 = ssub.s32 %s18, 2
      %s25 = sadd.s32 %s18, 1
      %s26 = ssub.s32 %s18, %s25
      %p27 = scmp.eq.s32.totalorder %s26, 0
      %s29 = sadd.s32 %s28, 1
      %s30 = scalar_select %p27, %s28, %s29
      %p33 = pneg %p27
      %p34 = scmp.eq.s32.totalorder %s18, 1
      %p35 = por %p33, %p34
      %p36 = scmp.ne.s32.totalorder %s28, %s31
      %p37 = scmp.eq.s32.totalorder %s18, 0
      %p38 = por %p36, %p37
      %p39 = scmp.ne.s32.totalorder %s28, %s31
      %p40 = scmp.eq.s32.totalorder %s23, 1
      %p41 = por %p39, %p40
      %p42 = scmp.ne.s32.totalorder %s31, %s32
      %p43 = scmp.eq.s32.totalorder %s23, 0
      %p44 = por %p42, %p43
      %p45 = scmp.ne.s32.totalorder %s31, %s32
      %p46 = scmp.eq.s32.totalorder %s24, 1
      %p47 = por %p45, %p46
      %p49 = scmp.ne.s32.totalorder %s32, %s48
      %p50 = scmp.eq.s32.totalorder %s24, 0
      %p51 = por %p49, %p50
      %s52 = ssub.s32 %s18, %s25
      %p53 = scmp.eq.s32.totalorder %s52, 0
      %s55 = sadd.s32 %s54, 1
      %s56 = scalar_select %p53, %s54, %s55
      %p59 = pneg %p53
      %p60 = scmp.eq.s32.totalorder %s18, 1
      %p61 = por %p59, %p60
      %p62 = scmp.ne.s32.totalorder %s54, %s57
      %p63 = scmp.eq.s32.totalorder %s18, 0
      %p64 = por %p62, %p63
      %p65 = scmp.ne.s32.totalorder %s54, %s57
      %p66 = scmp.eq.s32.totalorder %s23, 1
      %p67 = por %p65, %p66
      %p68 = scmp.ne.s32.totalorder %s57, %s58
      %p69 = scmp.eq.s32.totalorder %s23, 0
      %p70 = por %p68, %p69
      %p71 = scmp.ne.s32.totalorder %s57, %s58
      %p72 = scmp.eq.s32.totalorder %s24, 1
      %p73 = por %p71, %p72
      %p75 = scmp.ne.s32.totalorder %s58, %s74
      %p76 = scmp.eq.s32.totalorder %s24, 0
      %p77 = por %p75, %p76
      %s79 = sadd.s32 %s78, 1
      %p82 = scmp.eq.s32.totalorder %s18, 1
      %p83 = scmp.ne.s32.totalorder %s78, %s80
      %p84 = scmp.eq.s32.totalorder %s18, 0
      %p85 = por %p83, %p84
      %p86 = scmp.ne.s32.totalorder %s78, %s80
      %p87 = scmp.eq.s32.totalorder %s23, 1
      %p88 = por %p86, %p87
      %p89 = scmp.ne.s32.totalorder %s80, %s81
      %p90 = scmp.eq.s32.totalorder %s23, 0
      %p91 = por %p89, %p90
      %p92 = scmp.ne.s32.totalorder %s80, %s81
      %p93 = scmp.eq.s32.totalorder %s24, 1
      %p94 = por %p92, %p93
      %p96 = scmp.ne.s32.totalorder %s81, %s95
      %p97 = scmp.eq.s32.totalorder %s24, 0
      %p98 = por %p96, %p97
      %s100 = sadd.s32 %s99, 1
      %p103 = scmp.eq.s32.totalorder %s18, 1
      %p104 = scmp.ne.s32.totalorder %s99, %s101
      %p105 = scmp.eq.s32.totalorder %s18, 0
      %p106 = por %p104, %p105
      %p107 = scmp.ne.s32.totalorder %s99, %s101
      %p108 = scmp.eq.s32.totalorder %s23, 1
      %p109 = por %p107, %p108
      %p110 = scmp.ne.s32.totalorder %s101, %s102
      %p111 = scmp.eq.s32.totalorder %s23, 0
      %p112 = por %p110, %p111
      %p113 = scmp.ne.s32.totalorder %s101, %s102
      %p114 = scmp.eq.s32.totalorder %s24, 1
      %p115 = por %p113, %p114
      %p117 = scmp.ne.s32.totalorder %s102, %s116
      %p118 = scmp.eq.s32.totalorder %s24, 0
      %p119 = por %p117, %p118
      %s121 = sadd.s32 %s120, 1
      %p124 = scmp.eq.s32.totalorder %s18, 1
      %p125 = scmp.ne.s32.totalorder %s120, %s122
      %p126 = scmp.eq.s32.totalorder %s18, 0
      %p127 = por %p125, %p126
      %p128 = scmp.ne.s32.totalorder %s120, %s122
      %p129 = scmp.eq.s32.totalorder %s23, 1
      %p130 = por %p128, %p129
      %p131 = scmp.ne.s32.totalorder %s122, %s123
      %p132 = scmp.eq.s32.totalorder %s23, 0
      %p133 = por %p131, %p132
      %p134 = scmp.ne.s32.totalorder %s122, %s123
      %p135 = scmp.eq.s32.totalorder %s24, 1
      %p136 = por %p134, %p135
      %p138 = scmp.ne.s32.totalorder %s123, %s137
      %p139 = scmp.eq.s32.totalorder %s24, 0
      %p140 = por %p138, %p139
      %s142 = sadd.s32 %s141, 1
      %p145 = scmp.eq.s32.totalorder %s18, 1
      %p146 = scmp.ne.s32.totalorder %s141, %s143
      %p147 = scmp.eq.s32.totalorder %s18, 0
      %p148 = por %p146, %p147
      %p149 = scmp.ne.s32.totalorder %s141, %s143
      %p150 = scmp.eq.s32.totalorder %s23, 1
      %p151 = por %p149, %p150
      %p152 = scmp.ne.s32.totalorder %s143, %s144
      %p153 = scmp.eq.s32.totalorder %s23, 0
      %p154 = por %p152, %p153
      %p155 = scmp.ne.s32.totalorder %s143, %s144
      %p156 = scmp.eq.s32.totalorder %s24, 1
      %p157 = por %p155, %p156
      %p159 = scmp.ne.s32.totalorder %s144, %s158
      %p160 = scmp.eq.s32.totalorder %s24, 0
      %p161 = por %p159, %p160
      %s162 = ssub.s32 %s18, %s25
      %p163 = scmp.eq.s32.totalorder %s162, 0
      %s165 = sadd.s32 %s164, 1
      %s166 = scalar_select %p163, %s164, %s165
      %p169 = pneg %p163
      %p170 = scmp.eq.s32.totalorder %s18, 1
      %p171 = por %p169, %p170
      %p172 = scmp.ne.s32.totalorder %s164, %s167
      %p173 = scmp.eq.s32.totalorder %s18, 0
      %p174 = por %p172, %p173
      %p175 = scmp.ne.s32.totalorder %s164, %s167
      %p176 = scmp.eq.s32.totalorder %s23, 1
      %p177 = por %p175, %p176
      %p178 = scmp.ne.s32.totalorder %s167, %s168
      %p179 = scmp.eq.s32.totalorder %s23, 0
      %p180 = por %p178, %p179
      %p181 = scmp.ne.s32.totalorder %s167, %s168
      %p182 = scmp.eq.s32.totalorder %s24, 1
      %p183 = por %p181, %p182
      %p185 = scmp.ne.s32.totalorder %s168, %s184
      %p186 = scmp.eq.s32.totalorder %s24, 0
      %p187 = por %p185, %p186
      %p188 = scmp.le.s32.totalorder 1, %s18
      %p189 = scmp.lt.s32.totalorder %s18, 3
      %p190 = pnand %p188, %p189
      %p191 = pneg %p190
      // Predicated region
      $region9: #{tpu_custom_call.1} parent=5 // pred_check
        _
      $region10: #{tpu_custom_call.1} parent=5 // pred_check_branch
        %193 = sbr.rel (%p190) target = $region12
      $region11: #{tpu_custom_call.1} parent=5 // pred_region
        %s194 = ssub.s32 %s18, 1
        // Predicated region
        $region13: #{tpu_custom_call.1} parent=11 // pred_check
          %p195 = pneg %p91
        $region14: #{tpu_custom_call.1} parent=11 // pred_check_branch
          %197 = sbr.rel (%p195) target = $region16
        $region15: #{tpu_custom_call.1} parent=11 // pred_region
          _
        $region16: #{tpu_custom_call.1} parent=11 // pred_fallthru
          _
        // Predicated region
        $region17: #{tpu_custom_call.1} parent=11 // pred_check
          %p198 = pneg %p112
        $region18: #{tpu_custom_call.1} parent=11 // pred_check_branch
          %200 = sbr.rel (%p198) target = $region20
        $region19: #{tpu_custom_call.1} parent=11 // pred_region
          _
        $region20: #{tpu_custom_call.1} parent=11 // pred_fallthru
          _
        // Predicated region
        $region21: #{tpu_custom_call.1} parent=11 // pred_check
          %p201 = pneg %p133
        $region22: #{tpu_custom_call.1} parent=11 // pred_check_branch
          %203 = sbr.rel (%p201) target = $region24
        $region23: #{tpu_custom_call.1} parent=11 // pred_region
          _
        $region24: #{tpu_custom_call.1} parent=11 // pred_fallthru
          _
        // Predicated region
        $region25: #{tpu_custom_call.1} parent=11 // pred_check
          %p204 = pneg %p154
        $region26: #{tpu_custom_call.1} parent=11 // pred_check_branch
          %206 = sbr.rel (%p204) target = $region28
        $region27: #{tpu_custom_call.1} parent=11 // pred_region
          _
        $region28: #{tpu_custom_call.1} parent=11 // pred_fallthru
          _
      $region12: #{tpu_custom_call.1} parent=5 // pred_fallthru
        _
      %p207 = scmp.lt.s32.totalorder %s18, 2
      // Predicated region
      $region29: #{tpu_custom_call.1} parent=5 // pred_check
        %p208 = pneg %p207
      $region30: #{tpu_custom_call.1} parent=5 // pred_check_branch
        %210 = sbr.rel (%p208) target = $region32
      $region31: #{tpu_custom_call.1} parent=5 // pred_region
        // Predicated region
        $region33: #{tpu_custom_call.1} parent=31 // pred_check
          %p211 = pneg %p38
        $region34: #{tpu_custom_call.1} parent=31 // pred_check_branch
          %213 = sbr.rel (%p211) target = $region36
        $region35: #{tpu_custom_call.1} parent=31 // pred_region
          %s214 = sand.u32 %s28, 1
          %s215 = scalar_lea.sflag [#allocation3], %s214
          %s216 = sand.u32 %s28, 1
          %s217 = smul.addr %s216, 64
          %s218 = scalar_lea.vmem [#allocation2], %s217
          %s219 = smul.u32 8, %s18
          %s221 = ssub.s32 1024, 1024
          %222 = vsyncadd %s215, %s221
          %s223 = smul.addr %s219, 128
          %s224 = scalar_lea.hbm %s0, %s223
          %s225 = sshll.u32 %s218, 4
          %s226 = int_to_ptr.vmem [resolvable:$true] %s225
          %231 = dma.hbm_to_vmem [thread:$0]  %s224, 1024, %s226, %s215, 128, 128, 8
        $region36: #{tpu_custom_call.1} parent=31 // pred_fallthru
          _
        // Predicated region
        $region37: #{tpu_custom_call.1} parent=31 // pred_check
          %p232 = pneg %p64
        $region38: #{tpu_custom_call.1} parent=31 // pred_check_branch
          %234 = sbr.rel (%p232) target = $region40
        $region39: #{tpu_custom_call.1} parent=31 // pred_region
          %p235 = scmp.lt.s32.totalorder %s18, 1
          %s236 = scalar_select %p235, %s18, 1
          %s237 = smul.addr %s236, 8
          %s238 = scalar_lea.vmem %s1, %s237
        $region40: #{tpu_custom_call.1} parent=31 // pred_fallthru
          _
      $region32: #{tpu_custom_call.1} parent=5 // pred_fallthru
        _
      %p239 = scmp.le.s32.totalorder 1, %s18
      %p240 = scmp.lt.s32.totalorder %s18, 3
      %p241 = pnand %p239, %p240
      %p242 = pneg %p241
      // Predicated region
      $region41: #{tpu_custom_call.1} parent=5 // pred_check
        _
      $region42: #{tpu_custom_call.1} parent=5 // pred_check_branch
        %244 = sbr.rel (%p241) target = $region44
      $region43: #{tpu_custom_call.1} parent=5 // pred_region
        %s245 = ssub.s32 %s18, 1
        %s246 = sand.u32 %s31, 1
        %s247 = scalar_lea.sflag [#allocation3], %s246
        %s248 = sand.u32 %s31, 1
        %s249 = smul.addr %s248, 64
        %s250 = scalar_lea.vmem [#allocation2], %s249
        // Predicated region
        $region45: #{tpu_custom_call.1} parent=43 // pred_check
          %p251 = pneg %p44
        $region46: #{tpu_custom_call.1} parent=43 // pred_check_branch
          %253 = sbr.rel (%p251) target = $region48
        $region47: #{tpu_custom_call.1} parent=43 // pred_region
          %254 = dma.done %s247, 1024
        $region48: #{tpu_custom_call.1} parent=43 // pred_fallthru
          _
        %s255 = sand.u32 %s31, 1
        %s256 = scalar_lea.sflag [#allocation3], %s255
        %s257 = sand.u32 %s31, 1
        %s258 = smul.addr %s257, 64
        %s259 = scalar_lea.vmem [#allocation2], %s258
        %p260 = pneg %p44
        %p261 = pneg %p41
        %p262 = scmp.lt.s32.totalorder %s23, 1
        %s263 = scalar_select %p262, %s23, 1
        %s264 = smul.addr %s263, 8
        %s265 = scalar_lea.vmem %s1, %s264
        %p266 = pneg %p70
        %p267 = pneg %p67
        %p268 = pneg %p91
        %p269 = pneg %p88
        %p270 = pneg %p112
        %p271 = pneg %p109
        %p272 = pneg %p133
        %p273 = pneg %p130
        %p274 = pneg %p154
        %p275 = pneg %p151
        %p276 = pneg %p180
        %p277 = pneg %p177
        %s278 = sand.u32 %s167, 1
        %s279 = scalar_lea.sflag [#allocation4], %s278
        %s280 = sand.u32 %s167, 1
        %s281 = smul.addr %s280, 8
        %s282 = scalar_lea.vmem [#allocation5], %s281
        %s283 = smul.u32 8, %s23
        %p284 = scmp.lt.s32.totalorder %s23, 1
        %s285 = scalar_select %p284, %s23, 1
        %s286 = smul.addr %s285, 8
        %s287 = scalar_lea.vmem %s1, %s286
        %v289 = vld [vmem:[%s250] sm:$0xff]
        %v290 = vld [vmem:[%s250 + $0x8] sm:$0xff]
        %v291 = vld [vmem:[%s250 + $0x10] sm:$0xff]
        %v292 = vld [vmem:[%s250 + $0x18] sm:$0xff]
        %v293 = vld [vmem:[%s250 + $0x20] sm:$0xff]
        %v294 = vld [vmem:[%s250 + $0x28] sm:$0xff]
        %v295 = vld [vmem:[%s250 + $0x30] sm:$0xff]
        %v296 = vld [vmem:[%s250 + $0x38] sm:$0xff]
        %v297 = vpack.c.bf16 %v290, %v289
        %v298 = vpack.c.bf16 %v292, %v291
        %v299 = vpack.c.bf16 %v294, %v293
        %v300 = vpack.c.bf16 %v296, %v295
        %v301 = vld [vmem:[%s2] sm:$0xff]
        %v302 = vld [vmem:[%s2 + $0x8] sm:$0xff]
        %v303 = vpack.c.bf16 %v302, %v301
        %vm304 = vcmask 130048
        %v306 = vsel %vm304, %v297, 0
        %v309 = vsel %vm304, %v298, 0
        %v312 = vsel %vm304, %v299, 0
        %v315 = vsel %vm304, %v300, 0
        %317 = vmatprep.subr.bf16.mxu0 0
        %318 = vmatpush1.bf16.msra.mxu0 %v303
        %319 = vmatprep.subr.bf16.mxu0 0
        %320 = vmatpush1.bf16.msra.mxu0 0
        %321 = vmatprep.subr.bf16.mxu0 0
        %322 = vmatpush1.bf16.msra.mxu0 0
        %323 = vmatprep.subr.bf16.mxu0 0
        %324 = vmatpush1.bf16.msra.mxu0 0
        %325 = vmatprep.subr.bf16.mxu0 0
        %326 = vmatpush1.bf16.msra.mxu0 0
        %327 = vmatprep.subr.bf16.mxu0 0
        %328 = vmatpush1.bf16.msra.mxu0 0
        %329 = vmatprep.subr.bf16.mxu0 0
        %330 = vmatpush1.bf16.msra.mxu0 0
        %331 = vmatprep.subr.bf16.mxu0 0
        %332 = vmatpush1.bf16.msra.mxu0 0
        %333 = vmatprep.subr.bf16.mxu0 0
        %334 = vmatpush1.bf16.msra.mxu0 0
        %335 = vmatprep.subr.bf16.mxu0 0
        %336 = vmatpush1.bf16.msra.mxu0 0
        %337 = vmatprep.subr.bf16.mxu0 0
        %338 = vmatpush1.bf16.msra.mxu0 0
        %339 = vmatprep.subr.bf16.mxu0 0
        %340 = vmatpush1.bf16.msra.mxu0 0
        %341 = vmatprep.subr.bf16.mxu0 0
        %342 = vmatpush1.bf16.msra.mxu0 0
        %343 = vmatprep.subr.bf16.mxu0 0
        %344 = vmatpush1.bf16.msra.mxu0 0
        %345 = vmatprep.subr.bf16.mxu0 0
        %346 = vmatpush1.bf16.msra.mxu0 0
        %347 = vmatprep.subr.bf16.mxu0 0
        %348 = vmatpush1.bf16.msra.mxu0 0
        %349 = vmatprep.mubr.bf16.mxu0 0
        %350 = vmatmul.mubr.bf16.gmra.mrb[0].mxu0 %v306
        %v351 = vpop.f32.mrb[0].mxu0
        %v352 = vadd.f32 0.0, %v351
        %v353 = vpop.f32.mrb[0].mxu0
        %v354 = vpop.f32.mrb[0].mxu0
        %v355 = vadd.f32 0.0, %v354
        %v356 = vpop.f32.mrb[0].mxu0
        %357 = vmatprep.mubr.bf16.mxu0 0
        %358 = vmatmul.mubr.bf16.gmra.mrb[0].mxu0 %v309
        %v359 = vpop.f32.mrb[0].mxu0
        %v360 = vadd.f32 0.0, %v359
        %v361 = vpop.f32.mrb[0].mxu0
        %v362 = vpop.f32.mrb[0].mxu0
        %v363 = vadd.f32 0.0, %v362
        %v364 = vpop.f32.mrb[0].mxu0
        %365 = vmatprep.mubr.bf16.mxu0 0
        %366 = vmatmul.mubr.bf16.gmra.mrb[0].mxu0 %v312
        %v367 = vpop.f32.mrb[0].mxu0
        %v368 = vadd.f32 0.0, %v367
        %v369 = vpop.f32.mrb[0].mxu0
        %v370 = vpop.f32.mrb[0].mxu0
        %v371 = vadd.f32 0.0, %v370
        %v372 = vpop.f32.mrb[0].mxu0
        %373 = vmatprep.mubr.bf16.mxu0 0
        %374 = vmatmul.mubr.bf16.gmra.mrb[0].mxu0 %v315
        %v375 = vpop.f32.mrb[0].mxu0
        %v376 = vadd.f32 0.0, %v375
        %v377 = vpop.f32.mrb[0].mxu0
        %v378 = vpop.f32.mrb[0].mxu0
        %v379 = vadd.f32 0.0, %v378
        %v380 = vpop.f32.mrb[0].mxu0
        %381 = vdwg.mxu0
        %v390 = vrot.slane %v352, 1
        %v391 = vrot.slane %v355, 1
        %v392 = vrot.slane %v360, 1
        %v393 = vrot.slane %v363, 1
        %v394 = vrot.slane %v368, 1
        %v395 = vrot.slane %v371, 1
        %v396 = vrot.slane %v376, 1
        %v397 = vrot.slane %v379, 1
        %398 = vrot.lane.b32.xlu0 %v390, 112
        %v399 = vpop.permute.xlu0 %398
        %400 = vrot.lane.b32.xlu0 %v391, 112
        %v401 = vpop.permute.xlu0 %400
        %402 = vrot.lane.b32.xlu0 %v392, 112
        %v403 = vpop.permute.xlu0 %402
        %404 = vrot.lane.b32.xlu0 %v393, 112
        %v405 = vpop.permute.xlu0 %404
        %406 = vrot.lane.b32.xlu0 %v394, 112
        %v407 = vpop.permute.xlu0 %406
        %408 = vrot.lane.b32.xlu0 %v395, 112
        %v409 = vpop.permute.xlu0 %408
        %410 = vrot.lane.b32.xlu0 %v396, 112
        %v411 = vpop.permute.xlu0 %410
        %412 = vrot.lane.b32.xlu0 %v397, 112
        %v413 = vpop.permute.xlu0 %412
        %v422 = vadd.f32 %v352, %v399
        %v423 = vadd.f32 %v355, %v401
        %v424 = vadd.f32 %v360, %v403
        %v425 = vadd.f32 %v363, %v405
        %v426 = vadd.f32 %v368, %v407
        %v427 = vadd.f32 %v371, %v409
        %v428 = vadd.f32 %v376, %v411
        %v429 = vadd.f32 %v379, %v413
        %v430 = vrot.slane %v352, 2
        %v431 = vrot.slane %v355, 2
        %v432 = vrot.slane %v360, 2
        %v433 = vrot.slane %v363, 2
        %v434 = vrot.slane %v368, 2
        %v435 = vrot.slane %v371, 2
        %v436 = vrot.slane %v376, 2
        %v437 = vrot.slane %v379, 2
        %438 = vrot.lane.b32.xlu0 %v430, 96
        %v439 = vpop.permute.xlu0 %438
        %440 = vrot.lane.b32.xlu0 %v431, 96
        %v441 = vpop.permute.xlu0 %440
        %442 = vrot.lane.b32.xlu0 %v432, 96
        %v443 = vpop.permute.xlu0 %442
        %444 = vrot.lane.b32.xlu0 %v433, 96
        %v445 = vpop.permute.xlu0 %444
        %446 = vrot.lane.b32.xlu0 %v434, 96
        %v447 = vpop.permute.xlu0 %446
        %448 = vrot.lane.b32.xlu0 %v435, 96
        %v449 = vpop.permute.xlu0 %448
        %450 = vrot.lane.b32.xlu0 %v436, 96
        %v451 = vpop.permute.xlu0 %450
        %452 = vrot.lane.b32.xlu0 %v437, 96
        %v453 = vpop.permute.xlu0 %452
        %v462 = vadd.f32 %v422, %v439
        %v463 = vadd.f32 %v423, %v441
        %v464 = vadd.f32 %v424, %v443
        %v465 = vadd.f32 %v425, %v445
        %v466 = vadd.f32 %v426, %v447
        %v467 = vadd.f32 %v427, %v449
        %v468 = vadd.f32 %v428, %v451
        %v469 = vadd.f32 %v429, %v453
        %v470 = vld [vmem:[%s3] sm:$0x1]
        %v472 = vlaneseq
        %v473 = vshrl.u32 %v472, 7
        %v474 = vsub.s32 0, %v473
        %v475 = vrot.slane %v470, %v474
        %v477 = vadd.f32 %v462, %v475
        %v478 = vadd.f32 %v463, %v475
        %v479 = vadd.f32 %v464, %v475
        %v480 = vadd.f32 %v465, %v475
        %v481 = vadd.f32 %v466, %v475
        %v482 = vadd.f32 %v467, %v475
        %v483 = vadd.f32 %v468, %v475
        %v484 = vadd.f32 %v469, %v475
        %v485 = vmax.f32 %v477, 0.0
        %v486 = vmax.f32 %v478, 0.0
        %v487 = vmax.f32 %v479, 0.0
        %v488 = vmax.f32 %v480, 0.0
        %v489 = vmax.f32 %v481, 0.0
        %v490 = vmax.f32 %v482, 0.0
        %v491 = vmax.f32 %v483, 0.0
        %v492 = vmax.f32 %v484, 0.0
        %v493 = vld [vmem:[%s287] sm:$0xff]
        %v494 = vlaneseq
        %v495 = vshrl.u32 %v494, 7
        %v496 = vsub.s32 0, %v495
        %v497 = vrot.slane %v493, %v496
        %499 = vbcast.lane.b32.xlu0 %v497, 256
        %v500 = vpop.permute.xlu0 %499
        %v501 = vlaneseq
        %v502 = vshrl.u32 %v501, 7
        %v503 = vsub.s32 1, %v502
        %v504 = vrot.slane %v493, %v503
        %506 = vbcast.lane.b32.xlu0 %v504, 256
        %v507 = vpop.permute.xlu0 %506
        %v508 = vlaneseq
        %v509 = vshrl.u32 %v508, 7
        %v510 = vsub.s32 2, %v509
        %v511 = vrot.slane %v493, %v510
        %513 = vbcast.lane.b32.xlu0 %v511, 256
        %v514 = vpop.permute.xlu0 %513
        %v515 = vlaneseq
        %v516 = vshrl.u32 %v515, 7
        %v517 = vsub.s32 3, %v516
        %v518 = vrot.slane %v493, %v517
        %520 = vbcast.lane.b32.xlu0 %v518, 256
        %v521 = vpop.permute.xlu0 %520
        %v522 = vlaneseq
        %v523 = vshrl.u32 %v522, 7
        %v524 = vsub.s32 4, %v523
        %v525 = vrot.slane %v493, %v524
        %527 = vbcast.lane.b32.xlu0 %v525, 256
        %v528 = vpop.permute.xlu0 %527
        %v529 = vlaneseq
        %v530 = vshrl.u32 %v529, 7
        %v531 = vsub.s32 5, %v530
        %v532 = vrot.slane %v493, %v531
        %534 = vbcast.lane.b32.xlu0 %v532, 256
        %v535 = vpop.permute.xlu0 %534
        %v536 = vlaneseq
        %v537 = vshrl.u32 %v536, 7
        %v538 = vsub.s32 6, %v537
        %v539 = vrot.slane %v493, %v538
        %541 = vbcast.lane.b32.xlu0 %v539, 256
        %v542 = vpop.permute.xlu0 %541
        %v543 = vlaneseq
        %v544 = vshrl.u32 %v543, 7
        %v545 = vsub.s32 7, %v544
        %v546 = vrot.slane %v493, %v545
        %548 = vbcast.lane.b32.xlu0 %v546, 256
        %v549 = vpop.permute.xlu0 %548
        %vm550 = vcmp.gt.f32.partialorder %v500, 0.0
        %vm551 = vcmp.gt.f32.partialorder %v507, 0.0
        %vm552 = vcmp.gt.f32.partialorder %v514, 0.0
        %vm553 = vcmp.gt.f32.partialorder %v521, 0.0
        %vm554 = vcmp.gt.f32.partialorder %v528, 0.0
        %vm555 = vcmp.gt.f32.partialorder %v535, 0.0
        %vm556 = vcmp.gt.f32.partialorder %v542, 0.0
        %vm557 = vcmp.gt.f32.partialorder %v549, 0.0
        %v558 = vsel %vm550, 1, 0
        %v559 = vsel %vm551, 1, 0
        %v560 = vsel %vm552, 1, 0
        %v561 = vsel %vm553, 1, 0
        %v562 = vsel %vm554, 1, 0
        %v563 = vsel %vm555, 1, 0
        %v564 = vsel %vm556, 1, 0
        %v565 = vsel %vm557, 1, 0
        %vm566 = vcmp.eq.s32.totalorder %v558, 1
        %vm567 = vcmp.eq.s32.totalorder %v559, 1
        %vm568 = vcmp.eq.s32.totalorder %v560, 1
        %vm569 = vcmp.eq.s32.totalorder %v561, 1
        %vm570 = vcmp.eq.s32.totalorder %v562, 1
        %vm571 = vcmp.eq.s32.totalorder %v563, 1
        %vm572 = vcmp.eq.s32.totalorder %v564, 1
        %vm573 = vcmp.eq.s32.totalorder %v565, 1
        %v574 = vsel %vm566, %v485, -1e+30
        %v575 = vsel %vm567, %v486, -1e+30
        %v576 = vsel %vm568, %v487, -1e+30
        %v577 = vsel %vm569, %v488, -1e+30
        %v578 = vsel %vm570, %v489, -1e+30
        %v579 = vsel %vm571, %v490, -1e+30
        %v580 = vsel %vm572, %v491, -1e+30
        %v581 = vsel %vm573, %v492, -1e+30
        %vm582 = vcmask 128000
        %v583 = vsel %vm582, %v574, -inf
        %v584 = vrot.slane %v583, 4
        %v585 = vmax.f32 %v583, %v584
        %v586 = vrot.slane %v585, 2
        %v587 = vmax.f32 %v585, %v586
        %v588 = vrot.slane %v587, 1
        %v589 = vmax.f32 %v587, %v588
        %v590 = vsel %vm582, %v575, -inf
        %v591 = vrot.slane %v590, 4
        %v592 = vmax.f32 %v590, %v591
        %v593 = vrot.slane %v592, 2
        %v594 = vmax.f32 %v592, %v593
        %v595 = vrot.slane %v594, 1
        %v596 = vmax.f32 %v594, %v595
        %v597 = vsel %vm582, %v576, -inf
        %v598 = vrot.slane %v597, 4
        %v599 = vmax.f32 %v597, %v598
        %v600 = vrot.slane %v599, 2
        %v601 = vmax.f32 %v599, %v600
        %v602 = vrot.slane %v601, 1
        %v603 = vmax.f32 %v601, %v602
        %v604 = vsel %vm582, %v577, -inf
        %v605 = vrot.slane %v604, 4
        %v606 = vmax.f32 %v604, %v605
        %v607 = vrot.slane %v606, 2
        %v608 = vmax.f32 %v606, %v607
        %v609 = vrot.slane %v608, 1
        %v610 = vmax.f32 %v608, %v609
        %v611 = vsel %vm582, %v578, -inf
        %v612 = vrot.slane %v611, 4
        %v613 = vmax.f32 %v611, %v612
        %v614 = vrot.slane %v613, 2
        %v615 = vmax.f32 %v613, %v614
        %v616 = vrot.slane %v615, 1
        %v617 = vmax.f32 %v615, %v616
        %v618 = vsel %vm582, %v579, -inf
        %v619 = vrot.slane %v618, 4
        %v620 = vmax.f32 %v618, %v619
        %v621 = vrot.slane %v620, 2
        %v622 = vmax.f32 %v620, %v621
        %v623 = vrot.slane %v622, 1
        %v624 = vmax.f32 %v622, %v623
        %v625 = vsel %vm582, %v580, -inf
        %v626 = vrot.slane %v625, 4
        %v627 = vmax.f32 %v625, %v626
        %v628 = vrot.slane %v627, 2
        %v629 = vmax.f32 %v627, %v628
        %v630 = vrot.slane %v629, 1
        %v631 = vmax.f32 %v629, %v630
        %v632 = vsel %vm582, %v581, -inf
        %v633 = vrot.slane %v632, 4
        %v634 = vmax.f32 %v632, %v633
        %v635 = vrot.slane %v634, 2
        %v636 = vmax.f32 %v634, %v635
        %v637 = vrot.slane %v636, 1
        %v638 = vmax.f32 %v636, %v637
        %v639 = vmax.f32 %v589, 0.0
        %v640 = vmax.f32 %v596, 0.0
        %v641 = vmax.f32 %v603, 0.0
        %v642 = vmax.f32 %v610, 0.0
        %v643 = vmax.f32 %v617, 0.0
        %v644 = vmax.f32 %v624, 0.0
        %v645 = vmax.f32 %v631, 0.0
        %v646 = vmax.f32 %v638, 0.0
        %v647 = vpack.c.bf16 %v639, %v639
        %v648 = vpack.c.bf16 %v640, %v640
        %v649 = vpack.c.bf16 %v641, %v641
        %v650 = vpack.c.bf16 %v642, %v642
        %v651 = vpack.c.bf16 %v643, %v643
        %v652 = vpack.c.bf16 %v644, %v644
        %v653 = vpack.c.bf16 %v645, %v645
        %v654 = vpack.c.bf16 %v646, %v646
        %v655 = vld [vmem:[%s4] sm:$0xff]
        %v656 = vld [vmem:[%s4 + $0x8] sm:$0xff]
        %v657 = vpack.c.bf16 %v656, %v655
        %v658 = vld [vmem:[%s5] sm:$0x1]
        %v660 = vlaneseq
        %v661 = vshrl.u32 %v660, 7
        %v662 = vsub.s32 0, %v661
        %v663 = vrot.slane %v658, %v662
        %v673 = vunpack.c.l.b16 %v647
        %v674 = vunpack.c.l.b16 %v648
        %v675 = vunpack.c.l.b16 %v649
        %v676 = vunpack.c.l.b16 %v650
        %v677 = vunpack.c.l.b16 %v651
        %v678 = vunpack.c.l.b16 %v652
        %v679 = vunpack.c.l.b16 %v653
        %v680 = vunpack.c.l.b16 %v654
        %vm681 = vcmask 1041409
        %v682 = vsel %vm681, %v674, %v673
        %vm683 = vcmask 1042434
        %v684 = vsel %vm683, %v675, %v682
        %vm685 = vcmask 1043459
        %v686 = vsel %vm685, %v676, %v684
        %vm687 = vcmask 1044484
        %v688 = vsel %vm687, %v677, %v686
        %vm689 = vcmask 1045509
        %v690 = vsel %vm689, %v678, %v688
        %vm691 = vcmask 1046534
        %v692 = vsel %vm691, %v679, %v690
        %vm693 = vcmask 1047559
        %v694 = vsel %vm693, %v680, %v692
        %v695 = vpack.c.b16 %v694, %v694
        %v697 = vsel %vm304, %v695, 0
        %699 = vmatprep.subr.bf16.mxu0 0
        %700 = vmatpush1.bf16.msra.mxu0 %v657
        %701 = vmatprep.subr.bf16.mxu0 0
        %702 = vmatpush1.bf16.msra.mxu0 0
        %703 = vmatprep.subr.bf16.mxu0 0
        %704 = vmatpush1.bf16.msra.mxu0 0
        %705 = vmatprep.subr.bf16.mxu0 0
        %706 = vmatpush1.bf16.msra.mxu0 0
        %707 = vmatprep.subr.bf16.mxu0 0
        %708 = vmatpush1.bf16.msra.mxu0 0
        %709 = vmatprep.subr.bf16.mxu0 0
        %710 = vmatpush1.bf16.msra.mxu0 0
        %711 = vmatprep.subr.bf16.mxu0 0
        %712 = vmatpush1.bf16.msra.mxu0 0
        %713 = vmatprep.subr.bf16.mxu0 0
        %714 = vmatpush1.bf16.msra.mxu0 0
        %715 = vmatprep.subr.bf16.mxu0 0
        %716 = vmatpush1.bf16.msra.mxu0 0
        %717 = vmatprep.subr.bf16.mxu0 0
        %718 = vmatpush1.bf16.msra.mxu0 0
        %719 = vmatprep.subr.bf16.mxu0 0
        %720 = vmatpush1.bf16.msra.mxu0 0
        %721 = vmatprep.subr.bf16.mxu0 0
        %722 = vmatpush1.bf16.msra.mxu0 0
        %723 = vmatprep.subr.bf16.mxu0 0
        %724 = vmatpush1.bf16.msra.mxu0 0
        %725 = vmatprep.subr.bf16.mxu0 0
        %726 = vmatpush1.bf16.msra.mxu0 0
        %727 = vmatprep.subr.bf16.mxu0 0
        %728 = vmatpush1.bf16.msra.mxu0 0
        %729 = vmatprep.subr.bf16.mxu0 0
        %730 = vmatpush1.bf16.msra.mxu0 0
        %731 = vmatprep.mubr.bf16.mxu0 0
        %732 = vmatmul.mubr.bf16.gmra.mrb[0].mxu0 %v697
        %v733 = vpop.f32.mrb[0].mxu0
        %v734 = vadd.f32 %v663, %v733
        %v735 = vpop.f32.mrb[0].mxu0
        %v736 = vpop.f32.mrb[0].mxu0
        %v737 = vpop.f32.mrb[0].mxu0
        %738 = vdwg.mxu0
        %739 = vst.msk [vmem:[%s282] sm:$0xff] %vm304, %v734
        %s740 = sand.u32 %s167, 1
        %s741 = scalar_lea.sflag [#allocation4], %s740
        %s742 = sand.u32 %s167, 1
        %s743 = smul.addr %s742, 8
        %s744 = scalar_lea.vmem [#allocation5], %s743
        // Predicated region
        $region49: #{tpu_custom_call.1} parent=43 // pred_check
          %p745 = pneg %p177
        $region50: #{tpu_custom_call.1} parent=43 // pred_check_branch
          %747 = sbr.rel (%p745) target = $region52
        $region51: #{tpu_custom_call.1} parent=43 // pred_region
          %s749 = ssub.s32 128, 128
          %750 = vsyncadd %s741, %s749
          %s751 = smul.addr %s23, 128
          %s752 = scalar_lea.hbm %s6, %s751
          %s754 = sshll.u32 %s744, 4
          %s755 = int_to_ptr.vmem [resolvable:$true] %s754
          %757 = dma.vmem_to_hbm [thread:$0]  %s755, 128, %s752, %s741
        $region52: #{tpu_custom_call.1} parent=43 // pred_fallthru
          _
      $region44: #{tpu_custom_call.1} parent=5 // pred_fallthru
        _
      %p758 = scmp.le.s32.totalorder 2, %s18
      // Predicated region
      $region53: #{tpu_custom_call.1} parent=5 // pred_check
        %p759 = pneg %p758
      $region54: #{tpu_custom_call.1} parent=5 // pred_check_branch
        %761 = sbr.rel (%p759) target = $region56
      $region55: #{tpu_custom_call.1} parent=5 // pred_region
        %s762 = ssub.s32 %s18, 2
        // Predicated region
        $region57: #{tpu_custom_call.1} parent=55 // pred_check
          %p763 = pneg %p183
        $region58: #{tpu_custom_call.1} parent=55 // pred_check_branch
          %765 = sbr.rel (%p763) target = $region60
        $region59: #{tpu_custom_call.1} parent=55 // pred_region
          %s766 = sand.u32 %s168, 1
          %s767 = scalar_lea.sflag [#allocation4], %s766
          %s768 = sand.u32 %s168, 1
          %s769 = smul.addr %s768, 8
          %s770 = scalar_lea.vmem [#allocation5], %s769
          %771 = dma.done %s767, 128
        $region60: #{tpu_custom_call.1} parent=55 // pred_fallthru
          _
      $region56: #{tpu_custom_call.1} parent=5 // pred_fallthru
        _
    $region6: #{tpu_custom_call.1} parent=1 // loop_footer
      %s22 = sadd.s32 1, %s18
    $region7: #{tpu_custom_call.1} parent=1 // loop_footer_branch
      %17 = sbr.rel target = $region3
    $region8: #{tpu_custom_call.1} parent=1 // loop_exit
      _
    %772 = vsyncpa [#allocation3], 1
    %s773 = scalar_lea.sflag [#allocation3], 1
    %774 = vsyncpa %s773, 1
    %775 = vsyncpa [#allocation4], 1
    %s776 = scalar_lea.sflag [#allocation4], 1
    %777 = vsyncpa %s776, 1

</llo_original>
